<compile_context>
chip_gen: v7x
topology: tpu7x:2x2x1
jax: 0.10.0
libtpu: 0.0.40
codegen_flags: <defaults>
</compile_context>

<pallas_src>
import math

import numpy as np
import jax
import jax.numpy as jnp
from jax.experimental import pallas as pl
from jax.experimental.pallas import tpu as pltpu


# Gathered value for missing / padded neighbor slots: ReLU(_SENTINEL + z) == 0 always.
_SENTINEL = -1e30


def _edgeconv_kernel(yg_ref, z_ref, o_ref):
    """out = max_k ReLU(yg[k] + z), elementwise over a lane-dense (tile_m, LW) tile."""
    z = z_ref[...].astype(jnp.float32)                            # (T, LW)
    acc = jnp.maximum(yg_ref[0].astype(jnp.float32) + z, 0.0)
    for k in range(1, yg_ref.shape[0]):                           # K is small & static -> unrolled VPU maxes
        acc = jnp.maximum(acc, jnp.maximum(yg_ref[k].astype(jnp.float32) + z, 0.0))
    o_ref[...] = acc.astype(o_ref.dtype)


def _edge_index_to_neighbors(edge_index, num_nodes):
    """Vectorized host-side build of a padded (N, K) neighbor table.

    Unused slots hold the sentinel index `num_nodes` (points at the sentinel row).
    """
    ei = np.asarray(edge_index)
    if ei.size == 0:
        return np.full((num_nodes, 1), num_nodes, np.int32), 1
    src = ei[0].astype(np.int64)
    dst = ei[1].astype(np.int64)
    deg = np.bincount(dst, minlength=num_nodes)
    K = max(int(deg.max()), 1)
    order = np.argsort(dst, kind="stable")
    dst_s, src_s = dst[order], src[order]
    starts = np.concatenate([[0], np.cumsum(deg)[:-1]])
    slot = np.arange(dst_s.shape[0]) - starts[dst_s]
    nbr = np.full((num_nodes, K), num_nodes, dtype=np.int32)
    nbr[dst_s, slot] = src_s
    return nbr, K


def _round_up(a, b):
    return -(-a // b) * b


def graph_conv2(x, edge_index, w, b, *, gather_dtype=jnp.float32):
    """
    x:          (N, F) float32 node features
    edge_index: (2, E) int  -- edge_index[0]=source j, edge_index[1]=target i
    w:          (2F, C) float32 Linear weight (transposed from torch's (C, 2F))
    b:          (C,)    float32 Linear bias
    gather_dtype: dtype used for the gathered neighbor payload (use jnp.bfloat16 on
                  bandwidth-starved v5e; compute stays f32 in the kernel).
    returns     (N, C) float32
    """
    N, F = x.shape
    C = w.shape[1]
    assert w.shape[0] == 2 * F, "MLPLinear in_channels must equal 2*F for EdgeConv"

    nbr, K = _edge_index_to_neighbors(edge_index, N)

    x = jnp.asarray(x, jnp.float32)
    w = jnp.asarray(w, jnp.float32)
    b = jnp.asarray(b, jnp.float32)
    w_diff = w[F:, :]                    # acts on x_j
    w_comb = w[:F, :] - w_diff           # acts on x_i

    # Per-node pre-transform (plain XLA; O(N*F*C) instead of per-edge O(E*F*C)):
    #   message(j -> i) = ReLU(y[j] + z[i])
    y = jnp.dot(x, w_diff, preferred_element_type=jnp.float32)          # (N, C)
    z = jnp.dot(x, w_comb, preferred_element_type=jnp.float32) + b[None, :]

    # Fold node rows into lanes so every DMA'd / stored block is lane-dense
    # (last dim a multiple of 128).
    R = 128 // math.gcd(128, C)
    LW = R * C
    M_needed = -(-N // R)

    # Tile sizing: ~8 MiB live per grid step (Pallas double-buffers -> ~16 MiB),
    # which fits the default scoped-VMEM limit on v5e/v6e/v7x.
    gbytes = jnp.dtype(gather_dtype).itemsize
    bytes_per_frow = K * LW * gbytes + 2 * LW * 4
    tile_m = int(min(512, max(8, (8 << 20) // bytes_per_frow)))
    tile_m = max(8, (tile_m // 8) * 8)
    if M_needed <= tile_m:
        tile_m = M_needed
        M = M_needed
    else:
        # Even grid length so the single "parallel" axis shards cleanly over v7x's 2 TCs.
        M = _round_up(M_needed, 2 * tile_m)
    N_pad = M * R

    # Gather of the transformed neighbor features.  Missing / padding slots point at a
    # sentinel row so no mask tensor is needed inside the kernel.
    # TODO(synk): the row gather itself stays in XLA (materializes (K, N_pad, C) in HBM);
    # Mosaic has no general dynamic row-gather primitive to move it inside the kernel.
    nbr_full = np.full((N_pad, K), N, dtype=np.int32)
    nbr_full[:N] = nbr
    y_pad = jnp.concatenate([y, jnp.full((1, C), _SENTINEL, jnp.float32)], axis=0)
    yg = jnp.take(y_pad, jnp.asarray(nbr_full.T), axis=0).astype(gather_dtype)  # (K, N_pad, C)
    z_pad = jnp.pad(z, ((0, N_pad - N), (0, 0)))                                 # (N_pad, C)

    yg_f = yg.reshape(K, M, LW)     # contiguous reshape: node rows folded into lanes
    z_f = z_pad.reshape(M, LW)

    grid = (M // tile_m,)
    out_f = pl.pallas_call(
        _edgeconv_kernel,
        out_shape=jax.ShapeDtypeStruct((M, LW), jnp.float32),
        grid_spec=pltpu.PrefetchScalarGridSpec(
            num_scalar_prefetch=0,
            grid=grid,
            in_specs=[
                pl.BlockSpec((K, tile_m, LW), lambda i: (0, i, 0)),
                pl.BlockSpec((tile_m, LW), lambda i: (i, 0)),
            ],
            out_specs=pl.BlockSpec((tile_m, LW), lambda i: (i, 0)),
        ),
        compiler_params=pltpu.CompilerParams(
            dimension_semantics=("parallel",),
            vmem_limit_bytes=32 * 1024 * 1024,
        ),
    )(yg_f, z_f)

    return out_f.reshape(N_pad, C)[:N]


def _reference(x, edge_index, w, b):
    """Pure-numpy EdgeConv reference for correctness checking."""
    x = np.asarray(x, np.float64)
    w = np.asarray(w, np.float64)
    b = np.asarray(b, np.float64)
    N = x.shape[0]
    C = w.shape[1]
    src, dst = np.asarray(edge_index)
    out = np.zeros((N, C), np.float64)
    seen = np.zeros(N, bool)
    for s, d in zip(src, dst):
        feat = np.concatenate([x[d], x[s] - x[d]])
        msg = np.maximum(feat @ w + b, 0.0)
        out[d] = msg if not seen[d] else np.maximum(out[d], msg)
        seen[d] = True
    return out


if __name__ == "__main__":
    # Module config: GraphConv2(in_channels=8, out_channels=8)
    # -> EdgeConv nn = Linear(8, 8) + ReLU, so node feature width F = 8 // 2 = 4.
    in_channels, out_channels = 8, 8
    F = in_channels // 2
    C = out_channels
    N = 256  # (B x N) nodes total

    key = jax.random.PRNGKey(0)
    kx, kw, kb = jax.random.split(key, 3)
    x = jax.random.normal(kx, (N, F), dtype=jnp.float32)
    # torch Linear weight is (C_out, 2F); we store the transpose (2F, C_out).
    w = jax.random.normal(kw, (2 * F, C), dtype=jnp.float32) * (1.0 / np.sqrt(2 * F))
    b = jax.random.normal(kb, (C,), dtype=jnp.float32) * 0.1

    # Static graph: every node receives edges from (i-1)%N, (i+1)%N, and
    # even nodes additionally from (i+5)%N.  Built fully vectorized.
    ids = np.arange(N)
    ev = ids[ids % 2 == 0]
    src = np.concatenate([(ids - 1) % N, (ids + 1) % N, (ev + 5) % N])
    dst = np.concatenate([ids, ids, ev])
    edge_index = np.stack([src, dst]).astype(np.int32)

    out = graph_conv2(x, edge_index, w, b)
    out = jax.block_until_ready(out)

    ref = _reference(np.asarray(x), edge_index, np.asarray(w), np.asarray(b))
    np.testing.assert_allclose(np.asarray(out), ref, rtol=1e-4, atol=1e-5)
    print("KERNEL_OK")
</pallas_src>

<mosaic_0001>
module attributes {stable_mosaic.version = 11 : i64} {
  func.func @_edgeconv_kernel(%arg0: i32, %arg1: memref<3x16x128xf32, #tpu.memory_space<vmem>>, %arg2: memref<16x128xf32, #tpu.memory_space<vmem>>, %arg3: memref<16x128xf32, #tpu.memory_space<vmem>>) attributes {dimension_semantics = [#tpu.dimension_semantics<parallel>], iteration_bounds = array<i64: 1>, scalar_prefetch = 0 : i64, scratch_operands = 0 : i64, tpu.core_type = #tpu.core_type<tc>, window_params = [{transform_indices = @transform_0, window_bounds = array<i64: 3, 16, 128>}, {transform_indices = @transform_1, window_bounds = array<i64: 16, 128>}, {transform_indices = @transform_2, window_bounds = array<i64: 16, 128>}]} {
    %c0 = arith.constant 0 : index
    %c0_0 = arith.constant 0 : index
    %0 = vector.load %arg2[%c0, %c0_0] : memref<16x128xf32, #tpu.memory_space<vmem>>, vector<16x128xf32>
    %c0_1 = arith.constant 0 : index
    %c0_2 = arith.constant 0 : index
    %c0_3 = arith.constant 0 : index
    %1 = vector.load %arg1[%c0_1, %c0_2, %c0_3] : memref<3x16x128xf32, #tpu.memory_space<vmem>>, vector<1x16x128xf32>
    %2 = vector.shape_cast %1 : vector<1x16x128xf32> to vector<16x128xf32>
    %3 = arith.addf %2, %0 : vector<16x128xf32>
    %cst = arith.constant 0.000000e+00 : f32
    %4 = vector.broadcast %cst : f32 to vector<16x128xf32>
    %5 = arith.maximumf %3, %4 : vector<16x128xf32>
    %c1 = arith.constant 1 : index
    %c0_4 = arith.constant 0 : index
    %c0_5 = arith.constant 0 : index
    %6 = vector.load %arg1[%c1, %c0_4, %c0_5] : memref<3x16x128xf32, #tpu.memory_space<vmem>>, vector<1x16x128xf32>
    %7 = vector.shape_cast %6 : vector<1x16x128xf32> to vector<16x128xf32>
    %8 = arith.addf %7, %0 : vector<16x128xf32>
    %cst_6 = arith.constant 0.000000e+00 : f32
    %9 = vector.broadcast %cst_6 : f32 to vector<16x128xf32>
    %10 = arith.maximumf %8, %9 : vector<16x128xf32>
    %11 = arith.maximumf %5, %10 : vector<16x128xf32>
    %c2 = arith.constant 2 : index
    %c0_7 = arith.constant 0 : index
    %c0_8 = arith.constant 0 : index
    %12 = vector.load %arg1[%c2, %c0_7, %c0_8] : memref<3x16x128xf32, #tpu.memory_space<vmem>>, vector<1x16x128xf32>
    %13 = vector.shape_cast %12 : vector<1x16x128xf32> to vector<16x128xf32>
    %14 = arith.addf %13, %0 : vector<16x128xf32>
    %cst_9 = arith.constant 0.000000e+00 : f32
    %15 = vector.broadcast %cst_9 : f32 to vector<16x128xf32>
    %16 = arith.maximumf %14, %15 : vector<16x128xf32>
    %17 = arith.maximumf %11, %16 : vector<16x128xf32>
    %c0_10 = arith.constant 0 : index
    %c0_11 = arith.constant 0 : index
    %18 = vector.load %arg3[%c0_10, %c0_11] : memref<16x128xf32, #tpu.memory_space<vmem>>, vector<16x128xf32>
    tpu.vector_store %arg3[%c0_10, %c0_11], %17 {strides = array<i32>} : memref<16x128xf32, #tpu.memory_space<vmem>>, vector<16x128xf32>,
    return
  }
  func.func @transform_0(%arg0: i32) -> (i32, i32, i32) {
    %c0_i32 = arith.constant 0 : i32
    %c0_i32_0 = arith.constant 0 : i32
    %c0_i32_1 = arith.constant 0 : i32
    return %c0_i32, %arg0, %c0_i32_0 : i32, i32, i32
  }
  func.func @transform_1(%arg0: i32) -> (i32, i32) {
    %c0_i32 = arith.constant 0 : i32
    %c0_i32_0 = arith.constant 0 : i32
    return %arg0, %c0_i32 : i32, i32
  }
  func.func @transform_2(%arg0: i32) -> (i32, i32) {
    %c0_i32 = arith.constant 0 : i32
    %c0_i32_0 = arith.constant 0 : i32
    return %arg0, %c0_i32 : i32, i32
  }
}

</mosaic_0001>

<llo_original>
// kernel: tpu_custom_call.1
$region0: #{tpu_custom_call.1}
  #allocation0 [shape = 'u32[]', space=smem, size = 0x4, offset = 0x4, fixed_abs, tag = 'smem constant byte address 0x4 - core index']
  #allocation1 [shape = 'u32[144,128]{1,0:T(1,128)}', space=vmem, size = 0x12000, scoped, tag = 'internal scratch']
  %s0 = inlined_call_operand.hbm [shape: f32[3,16,128], index: 0, kind: input, shape index: {}]
  %s1 = inlined_call_operand.hbm [shape: f32[16,128], index: 1, kind: input, shape index: {}]
  %s2 = inlined_call_operand.hbm [shape: f32[16,128], index: 2, kind: output, shape index: {}]
  %s3 = sld [smem:[#allocation0]]
  $region26: #{tpu_custom_call.1} parent=0
    _
  %s5 = ssub.s32 1, %s3
  %s6 = scalar_select 0, %s5, %s3
  $region1: #{tpu_custom_call.1} parent=0
    #allocation2 [shape = 'u8[24576]{0}', space=vmem, size = 0x6000, scoped, tag = 'input window, operand 0, single buffered']
    #allocation3 [shape = 's32[1]{0}', space=sflag, size = 0x4, scoped, tag = 'scoped memory for tpu_custom_call.1']
    #allocation4 [shape = 's32[1]{0}', space=sflag, size = 0x4, scoped, tag = 'scoped memory for tpu_custom_call.1']
    #allocation5 [shape = 'u8[8192]{0}', space=vmem, size = 0x2000, scoped, tag = 'input window, operand 1, single buffered']
    #allocation6 [shape = 's32[1]{0}', space=sflag, size = 0x4, scoped, tag = 'scoped memory for tpu_custom_call.1']
    #allocation7 [shape = 'u8[8192]{0}', space=vmem, size = 0x2000, scoped, tag = 'output window, operand 0, single buffered']
    %7 = vsyncpa [#allocation3], 0
    %8 = vsyncpa [#allocation6], 0
    %9 = vsyncpa [#allocation4], 0
    // Predicated region
    $region2: #{tpu_custom_call.1} parent=1 // pred_check
      _
    $region3: #{tpu_custom_call.1} parent=1 // pred_check_branch
      %11 = sbr.rel (0) target = $region5
    $region4: #{tpu_custom_call.1} parent=1 // pred_region
      %s13 = ssub.s32 768, 768
      %14 = vsyncadd [#allocation3], %s13
      %s15 = sshll.u32 [#allocation2], 4
      %s16 = int_to_ptr.vmem [resolvable:$true] %s15
      %21 = dma.hbm_to_vmem [thread:$0]  %s0, 768, %s16, [#allocation3], 128, 128, 8
    $region5: #{tpu_custom_call.1} parent=1 // pred_fallthru
      _
    // Predicated region
    $region6: #{tpu_custom_call.1} parent=1 // pred_check
      _
    $region7: #{tpu_custom_call.1} parent=1 // pred_check_branch
      %23 = sbr.rel (0) target = $region9
    $region8: #{tpu_custom_call.1} parent=1 // pred_region
      %s25 = ssub.s32 256, 256
      %26 = vsyncadd [#allocation6], %s25
      %s27 = sshll.u32 [#allocation5], 4
      %s28 = int_to_ptr.vmem [resolvable:$true] %s27
      %33 = dma.hbm_to_vmem [thread:$0]  %s1, 256, %s28, [#allocation6], 128, 128, 8
    $region9: #{tpu_custom_call.1} parent=1 // pred_fallthru
      _
    // Predicated region
    $region10: #{tpu_custom_call.1} parent=1 // pred_check
      _
    $region11: #{tpu_custom_call.1} parent=1 // pred_check_branch
      %35 = sbr.rel (0) target = $region13
    $region12: #{tpu_custom_call.1} parent=1 // pred_region
      %36 = dma.done [#allocation3], 768
    $region13: #{tpu_custom_call.1} parent=1 // pred_fallthru
      _
    // Predicated region
    $region14: #{tpu_custom_call.1} parent=1 // pred_check
      _
    $region15: #{tpu_custom_call.1} parent=1 // pred_check_branch
      %38 = sbr.rel (0) target = $region17
    $region16: #{tpu_custom_call.1} parent=1 // pred_region
      %39 = dma.done [#allocation6], 256
    $region17: #{tpu_custom_call.1} parent=1 // pred_fallthru
      _
    %v40 = vld [vmem:[#allocation5] sm:$0xff]
    %v41 = vld [vmem:[#allocation5 + $0x8] sm:$0xff]
    %v42 = vld [vmem:[#allocation2] sm:$0xff]
    %v43 = vld [vmem:[#allocation2 + $0x8] sm:$0xff]
    %v44 = vadd.f32 %v42, %v40
    %v45 = vadd.f32 %v43, %v41
    %v46 = vmax.f32 %v44, 0.0
    %v47 = vmax.f32 %v45, 0.0
    %s48 = scalar_lea.vmem [#allocation2], 16
    %v49 = vld [vmem:[%s48] sm:$0xff]
    %v50 = vld [vmem:[%s48 + $0x8] sm:$0xff]
    %v51 = vadd.f32 %v49, %v40
    %v52 = vadd.f32 %v50, %v41
    %v53 = vmax.f32 %v51, 0.0
    %v54 = vmax.f32 %v52, 0.0
    %v55 = vmax.f32 %v46, %v53
    %v56 = vmax.f32 %v47, %v54
    %s57 = scalar_lea.vmem [#allocation2], 32
    %v58 = vld [vmem:[%s57] sm:$0xff]
    %v59 = vld [vmem:[%s57 + $0x8] sm:$0xff]
    %v60 = vadd.f32 %v58, %v40
    %v61 = vadd.f32 %v59, %v41
    %v62 = vmax.f32 %v60, 0.0
    %v63 = vmax.f32 %v61, 0.0
    %v64 = vmax.f32 %v55, %v62
    %v65 = vmax.f32 %v56, %v63
    %66 = vst [vmem:[#allocation7] sm:$0xff] %v64
    %67 = vst [vmem:[#allocation7 + $0x8] sm:$0xff] %v65
    // Predicated region
    $region18: #{tpu_custom_call.1} parent=1 // pred_check
      _
    $region19: #{tpu_custom_call.1} parent=1 // pred_check_branch
      %69 = sbr.rel (0) target = $region21
    $region20: #{tpu_custom_call.1} parent=1 // pred_region
      %s71 = ssub.s32 256, 256
      %72 = vsyncadd [#allocation4], %s71
      %s73 = sshll.u32 [#allocation7], 4
      %s74 = int_to_ptr.vmem [resolvable:$true] %s73
      %79 = dma.vmem_to_hbm [thread:$0]  %s74, 256, %s2, [#allocation4], 128, 128, 8
    $region21: #{tpu_custom_call.1} parent=1 // pred_fallthru
      _
    // Predicated region
    $region22: #{tpu_custom_call.1} parent=1 // pred_check
      _
    $region23: #{tpu_custom_call.1} parent=1 // pred_check_branch
      %81 = sbr.rel (0) target = $region25
    $region24: #{tpu_custom_call.1} parent=1 // pred_region
      %82 = dma.done [#allocation4], 256
    $region25: #{tpu_custom_call.1} parent=1 // pred_fallthru
      _
    %83 = vsyncpa [#allocation3], 1
    %84 = vsyncpa [#allocation6], 1
    %85 = vsyncpa [#allocation4], 1

</llo_original>
